<compile_context>
chip_gen: v5e
topology: v5e:2x2
jax: 0.10.0
libtpu: 0.0.40
codegen_flags: <defaults>
</compile_context>

<pallas_src>
import functools

import jax
import jax.numpy as jnp
from jax.experimental import pallas as pl
from jax.experimental.pallas import tpu as pltpu

_LANE = 128
_MAX_ROW_TILE = 2048                    # 2048*128 px per step
_VMEM_LIMIT_BYTES = 32 * 1024 * 1024    # <= physical VMEM on v5e/v6e/v7x, >> working set

_INV_12_92 = 1.0 / 12.92
_INV_1_055 = 1.0 / 1.055
_INV_XN = 1.0 / 0.95047
_INV_ZN = 1.0 / 1.08883


def _linearize(c):
    return jnp.where(c > 0.04045, ((c + 0.055) * _INV_1_055) ** 2.4, c * _INV_12_92)


def _fxyz(r, g, b):
    """sRGB in [0,1] -> f(X/Xn), f(Y), f(Z/Zn) for the LAB transform."""
    r = _linearize(r)
    g = _linearize(g)
    b = _linearize(b)
    x = (0.412453 * r + 0.357580 * g + 0.180423 * b) * _INV_XN
    y = 0.212671 * r + 0.715160 * g + 0.072169 * b
    z = (0.019334 * r + 0.119193 * g + 0.950227 * b) * _INV_ZN

    def f(t):
        return jnp.where(t > 0.008856, t ** (1.0 / 3.0), 7.787 * t + 4.0 / 29.0)

    return f(x), f(y), f(z)


def _lab_tile_loss(tgt_ref, src_ref, with_L):
    """Per-pixel channel-mean |LAB(tgt) - LAB(src)| for one (3, RT, 128) tile."""
    fxt, fyt, fzt = _fxyz(tgt_ref[0].astype(jnp.float32),
                          tgt_ref[1].astype(jnp.float32),
                          tgt_ref[2].astype(jnp.float32))
    fxs, fys, fzs = _fxyz(src_ref[0].astype(jnp.float32),
                          src_ref[1].astype(jnp.float32),
                          src_ref[2].astype(jnp.float32))
    # L = 116*fy - 16, a = 500*(fx - fy), b = 200*(fy - fz)  ->  diffs computed directly.
    da = 500.0 * jnp.abs((fxt - fyt) - (fxs - fys))
    db = 200.0 * jnp.abs((fyt - fzt) - (fys - fzs))
    if with_L:
        dl = 116.0 * jnp.abs(fyt - fys)
        return (dl + da + db) * (1.0 / 3.0)
    return (da + db) * 0.5


def _fold8(x):
    """(R, 128) f32 -> (8, 128) partial sum via pure vreg adds on the VPU."""
    r = x.shape[0]
    if r % 8 == 0:
        return x.reshape(r // 8, 8, _LANE).sum(axis=0)
    # Rare single-tile path with an odd row count: column sums placed in sublane 0
    # (zeros elsewhere) so the host-side jnp.sum stays consistent.
    col = x.sum(axis=0, keepdims=True)                                  # (1, 128)
    row_id = jax.lax.broadcasted_iota(jnp.int32, (8, _LANE), 0)
    return jnp.where(row_id == 0, jnp.broadcast_to(col, (8, _LANE)), 0.0)


def _lab_kernel(*refs, with_L, n_rows, row_tile, n_tiles, n_ti, has_valid, overshoot):
    if has_valid:
        tgt_ref, src_ref, valid_ref, num_ref, den_ref = refs
    else:
        tgt_ref, src_ref, num_ref = refs
        valid_ref = den_ref = None

    h = pl.program_id(1)              # 2-way row split (keeps both v7x TCs busy)
    t = pl.program_id(2)              # reduction axis (output block resident across it)
    gt = h * n_ti + t                 # global row-tile index

    @pl.when(t == 0)
    def _():
        num_ref[...] = jnp.zeros_like(num_ref)
        if has_valid:
            den_ref[...] = jnp.zeros_like(den_ref)

    def accumulate():
        loss = _lab_tile_loss(tgt_ref, src_ref, with_L)                 # (RT, 128) f32
        v = valid_ref[...].astype(jnp.float32) if has_valid else None

        def add(l_c, v_c):
            if has_valid:
                num_ref[...] += _fold8(l_c * v_c)
                den_ref[...] += _fold8(v_c)
            else:
                num_ref[...] += _fold8(l_c)

        if n_rows % row_tile != 0:
            # Ragged tail: only the globally-last tile pays the iota/compare/select cost.
            @pl.when(gt == n_tiles - 1)
            def _():
                rows = (jax.lax.broadcasted_iota(jnp.int32, (row_tile, _LANE), 0)
                        + gt * row_tile)
                inb = rows < n_rows
                lm = jnp.where(inb, loss, 0.0)      # mask loss BEFORE the multiply (NaN-safe)
                vm = jnp.where(inb, v, 0.0) if has_valid else None
                add(lm, vm)

            @pl.when(gt != n_tiles - 1)
            def _():
                add(loss, v)
        else:
            add(loss, v)

    if overshoot:
        # n_tiles odd and split 2-way: the very last inner step has no real tile.
        pl.when(gt < n_tiles)(accumulate)
    else:
        accumulate()


def lab_space_loss(tgt_images, src_images, valid=None, *, loss_weight=1.0,
                   with_L=False, max_row_tile=_MAX_ROW_TILE):
    """JAX/Pallas equivalent of LABSpaceLoss.forward (img_norm_cfg=None).

    Images may be f32 or bf16 (cast to f32 inside the kernel); `valid` may be
    f32 / uint8 / bool (bool is passed as uint8, 1 byte/px of HBM traffic).
    """
    B, C, H, W = tgt_images.shape
    assert C == 3, "expected RGB images"
    HW = H * W
    N = B * HW
    has_valid = valid is not None

    if has_valid and valid.dtype == jnp.bool_:
        valid = valid.astype(jnp.uint8)          # keep the HBM mask at 1 byte/pixel

    if HW % _LANE == 0:
        # Free reshape: contiguous NCHW -> (B, 3, HW/128, 128); no host copies.
        n_rows = HW // _LANE
        tgt_r = tgt_images.reshape(B, 3, n_rows, _LANE)
        src_r = src_images.reshape(B, 3, n_rows, _LANE)
        valid_r = valid.reshape(B, n_rows, _LANE) if has_valid else None
    else:
        # TODO(synk): fallback materializes padded copies (only for resolutions where
        #             H*W is not a multiple of 128).
        pad = (-HW) % _LANE
        n_rows = (HW + pad) // _LANE
        tgt_r = jnp.pad(tgt_images.reshape(B, 3, HW),
                        ((0, 0), (0, 0), (0, pad))).reshape(B, 3, n_rows, _LANE)
        src_r = jnp.pad(src_images.reshape(B, 3, HW),
                        ((0, 0), (0, 0), (0, pad))).reshape(B, 3, n_rows, _LANE)
        v = valid.reshape(B, HW) if has_valid else jnp.ones((B, HW), jnp.uint8)
        valid_r = jnp.pad(v, ((0, 0), (0, pad))).reshape(B, n_rows, _LANE)
        has_valid = True  # padded pixels must be excluded from num and den

    # Row tile: the whole image column if it fits, else up to max_row_tile rows per step.
    # When tiling (< n_rows) keep it a multiple of 32 so blocks are legal for any dtype
    # (f32 / bf16 images, uint8 masks).
    row_tile = n_rows if n_rows <= max_row_tile else max_row_tile
    if row_tile < n_rows:
        row_tile = max(32, row_tile - (row_tile % 32))

    n_tiles = pl.cdiv(n_rows, row_tile)
    n_par = 2 if n_tiles >= 2 else 1             # both v7x TCs even at batch size 1
    n_ti = pl.cdiv(n_tiles, n_par)
    overshoot = n_par * n_ti > n_tiles
    grid = (B, n_par, n_ti)

    if overshoot:
        def tile_idx(h, t):
            return jnp.minimum(h * n_ti + t, n_tiles - 1)
    else:
        def tile_idx(h, t):
            return h * n_ti + t

    img_spec = pl.BlockSpec((None, 3, row_tile, _LANE),
                            lambda b, h, t: (b, 0, tile_idx(h, t), 0))
    val_spec = pl.BlockSpec((None, row_tile, _LANE),
                            lambda b, h, t: (b, tile_idx(h, t), 0))
    out_spec = pl.BlockSpec((None, 8, _LANE),
                            lambda b, h, t: (b * n_par + h, 0, 0))
    out8 = jax.ShapeDtypeStruct((B * n_par, 8, _LANE), jnp.float32)

    img_bytes = 2 * 3 * jnp.dtype(tgt_images.dtype).itemsize
    mask_bytes = jnp.dtype(valid_r.dtype).itemsize if has_valid else 0
    cost = pl.CostEstimate(
        flops=int(150 * N),
        transcendentals=int(24 * N),          # 12 pows/px, each pow ~= exp + log
        bytes_accessed=int((img_bytes + mask_bytes) * N
                           + (2 if has_valid else 1) * B * n_par * 8 * _LANE * 4))
    cparams = pltpu.CompilerParams(
        dimension_semantics=("parallel", "parallel", "arbitrary"),
        vmem_limit_bytes=_VMEM_LIMIT_BYTES)

    kernel = functools.partial(_lab_kernel, with_L=with_L, n_rows=n_rows,
                               row_tile=row_tile, n_tiles=n_tiles, n_ti=n_ti,
                               has_valid=has_valid, overshoot=overshoot)

    if has_valid:
        num, den = pl.pallas_call(
            kernel,
            out_shape=(out8, out8),
            grid=grid,
            in_specs=[img_spec, img_spec, val_spec],
            out_specs=(out_spec, out_spec),
            compiler_params=cparams,
            cost_estimate=cost,
        )(tgt_r, src_r, valid_r)
        num_total = jnp.sum(num)
        den_total = jnp.sum(den)
    else:
        num = pl.pallas_call(
            kernel,
            out_shape=out8,
            grid=grid,
            in_specs=[img_spec, img_spec],
            out_specs=out_spec,
            compiler_params=cparams,
            cost_estimate=cost,
        )(tgt_r, src_r)
        num_total = jnp.sum(num)
        den_total = jnp.float32(N)

    # torch: sum(loss * valid) / max(1, valid.sum()) * loss_weight
    return num_total / jnp.maximum(1.0, den_total) * loss_weight


def _reference(tgt, src, valid, loss_weight, with_L):
    """Pure-JAX reference of the same math, for sanity checking."""
    def rgb_to_lab_nchw(img):
        img = img.astype(jnp.float32)
        lin = jnp.where(img > 0.04045, ((img + 0.055) / 1.055) ** 2.4, img / 12.92)
        r, g, b = lin[:, 0], lin[:, 1], lin[:, 2]
        x = (0.412453 * r + 0.357580 * g + 0.180423 * b) / 0.95047
        y = 0.212671 * r + 0.715160 * g + 0.072169 * b
        z = (0.019334 * r + 0.119193 * g + 0.950227 * b) / 1.08883
        f = lambda t: jnp.where(t > 0.008856, t ** (1.0 / 3.0), 7.787 * t + 4.0 / 29.0)
        fx, fy, fz = f(x), f(y), f(z)
        return jnp.stack([116.0 * fy - 16.0, 500.0 * (fx - fy), 200.0 * (fy - fz)], axis=1)

    t_lab, s_lab = rgb_to_lab_nchw(tgt), rgb_to_lab_nchw(src)
    if with_L:
        loss = jnp.abs(t_lab - s_lab).mean(axis=1)
    else:
        loss = jnp.abs(t_lab[:, 1:] - s_lab[:, 1:]).mean(axis=1)
    if valid is None:
        valid = jnp.ones_like(loss)
    valid = valid.astype(jnp.float32)
    return jnp.sum(loss * valid) / jnp.maximum(1.0, valid.sum()) * loss_weight


if __name__ == "__main__":
    key = jax.random.PRNGKey(0)
    k1, k2, k3, k4, k5, k6, k7 = jax.random.split(key, 7)

    B, C, H, W = 2, 3, 16, 16
    tgt = jax.random.uniform(k1, (B, C, H, W), jnp.float32)       # RGB in [0, 1]
    src = jax.random.uniform(k2, (B, C, H, W), jnp.float32)
    valid = (jax.random.uniform(k3, (B, H, W)) > 0.3).astype(jnp.float32)

    # 1) main path: f32 valid mask, no L channel
    out = jax.block_until_ready(lab_space_loss(tgt, src, valid, loss_weight=1.0, with_L=False))
    ref = _reference(tgt, src, valid, 1.0, False)
    assert jnp.allclose(out, ref, rtol=1e-3, atol=1e-3), (out, ref)

    # 2) with_L=True
    out2 = jax.block_until_ready(lab_space_loss(tgt, src, valid, with_L=True))
    ref2 = _reference(tgt, src, valid, 1.0, True)
    assert jnp.allclose(out2, ref2, rtol=1e-3, atol=1e-3), (out2, ref2)

    # 3) valid=None (unmasked kernel, static denominator)
    out3 = jax.block_until_ready(lab_space_loss(tgt, src, None, loss_weight=2.0))
    ref3 = _reference(tgt, src, None, 2.0, False)
    assert jnp.allclose(out3, ref3, rtol=1e-3, atol=1e-3), (out3, ref3)

    # 4) H*W not a multiple of 128 (pad fallback path)
    tgt_s = jax.random.uniform(k4, (2, 3, 10, 10), jnp.float32)
    src_s = jax.random.uniform(k5, (2, 3, 10, 10), jnp.float32)
    out4 = jax.block_until_ready(lab_space_loss(tgt_s, src_s, None))
    ref4 = _reference(tgt_s, src_s, None, 1.0, False)
    assert jnp.allclose(out4, ref4, rtol=1e-3, atol=1e-3), (out4, ref4)

    # 5) multi-tile + ragged tail + 2-way row split + bool/uint8 mask
    #    (max_row_tile lowered so these code paths are exercised at a small shape:
    #     96*96 = 72 lane-rows -> 3 tiles of 32, last one ragged, split over 2 halves)
    Hs = Ws = 96
    tgt_m = jax.random.uniform(k6, (2, 3, Hs, Ws), jnp.float32)
    src_m = jax.random.uniform(k7, (2, 3, Hs, Ws), jnp.float32)
    valid_m = jax.random.uniform(k3, (2, Hs, Ws)) > 0.5           # bool mask
    out5 = jax.block_until_ready(lab_space_loss(tgt_m, src_m, valid_m, max_row_tile=32))
    ref5 = _reference(tgt_m, src_m, valid_m.astype(jnp.float32), 1.0, False)
    assert jnp.allclose(out5, ref5, rtol=1e-3, atol=1e-3), (out5, ref5)

    # 6) bf16 images (no wrapper-side upcast; kernel casts to f32 in VMEM)
    out6 = jax.block_until_ready(
        lab_space_loss(tgt.astype(jnp.bfloat16), src.astype(jnp.bfloat16), valid))
    ref6 = _reference(tgt.astype(jnp.bfloat16), src.astype(jnp.bfloat16), valid, 1.0, False)
    assert jnp.allclose(out6, ref6, rtol=1e-3, atol=1e-3), (out6, ref6)

    print("KERNEL_OK")
</pallas_src>

<mosaic_0001>
module attributes {stable_mosaic.version = 11 : i64} {
  func.func @_lab_kernel(%arg0: i32, %arg1: i32, %arg2: i32, %arg3: memref<1x3x2x128xf32, #tpu.memory_space<vmem>>, %arg4: memref<1x3x2x128xf32, #tpu.memory_space<vmem>>, %arg5: memref<1x2x128xf32, #tpu.memory_space<vmem>>, %arg6: memref<1x8x128xf32, #tpu.memory_space<vmem>>, %arg7: memref<1x8x128xf32, #tpu.memory_space<vmem>>) attributes {dimension_semantics = [#tpu.dimension_semantics<parallel>, #tpu.dimension_semantics<parallel>, #tpu.dimension_semantics<arbitrary>], iteration_bounds = array<i64: 2, 1, 1>, scalar_prefetch = 0 : i64, scratch_operands = 0 : i64, tpu.core_type = #tpu.core_type<tc>, window_params = [{transform_indices = @transform_0, window_bounds = array<i64: 1, 3, 2, 128>}, {transform_indices = @transform_1, window_bounds = array<i64: 1, 3, 2, 128>}, {transform_indices = @transform_2, window_bounds = array<i64: 1, 2, 128>}, {transform_indices = @transform_3, window_bounds = array<i64: 1, 8, 128>}, {transform_indices = @transform_4, window_bounds = array<i64: 1, 8, 128>}]} {
    %c0_i32 = arith.constant 0 : i32
    %0 = arith.cmpi eq, %arg2, %c0_i32 : i32
    %1 = arith.extui %0 : i1 to i32
    %c0_i32_0 = arith.constant 0 : i32
    %2 = arith.cmpi ne, %1, %c0_i32_0 : i32
    scf.if %2 {
      %cst_121 = arith.constant 0.000000e+00 : f32
      %239 = vector.broadcast %cst_121 : f32 to vector<8x128xf32>
      %c0_122 = arith.constant 0 : index
      %c0_123 = arith.constant 0 : index
      %c0_124 = arith.constant 0 : index
      %240 = vector.load %arg6[%c0_122, %c0_123, %c0_124] : memref<1x8x128xf32, #tpu.memory_space<vmem>>, vector<1x8x128xf32>
      %241 = vector.shape_cast %240 : vector<1x8x128xf32> to vector<8x128xf32>
      %242 = vector.shape_cast %239 : vector<8x128xf32> to vector<1x8x128xf32>
      tpu.vector_store %arg6[%c0_122, %c0_123, %c0_124], %242 {strides = array<i32>} : memref<1x8x128xf32, #tpu.memory_space<vmem>>, vector<1x8x128xf32>,
      %cst_125 = arith.constant 0.000000e+00 : f32
      %243 = vector.broadcast %cst_125 : f32 to vector<8x128xf32>
      %c0_126 = arith.constant 0 : index
      %c0_127 = arith.constant 0 : index
      %c0_128 = arith.constant 0 : index
      %244 = vector.load %arg7[%c0_126, %c0_127, %c0_128] : memref<1x8x128xf32, #tpu.memory_space<vmem>>, vector<1x8x128xf32>
      %245 = vector.shape_cast %244 : vector<1x8x128xf32> to vector<8x128xf32>
      %246 = vector.shape_cast %243 : vector<8x128xf32> to vector<1x8x128xf32>
      tpu.vector_store %arg7[%c0_126, %c0_127, %c0_128], %246 {strides = array<i32>} : memref<1x8x128xf32, #tpu.memory_space<vmem>>, vector<1x8x128xf32>,
    } else {
    }
    %c0 = arith.constant 0 : index
    %c0_1 = arith.constant 0 : index
    %c0_2 = arith.constant 0 : index
    %c0_3 = arith.constant 0 : index
    %3 = vector.load %arg3[%c0, %c0_1, %c0_2, %c0_3] : memref<1x3x2x128xf32, #tpu.memory_space<vmem>>, vector<1x1x2x128xf32>
    %4 = vector.shape_cast %3 : vector<1x1x2x128xf32> to vector<2x128xf32>
    %c0_4 = arith.constant 0 : index
    %c1 = arith.constant 1 : index
    %c0_5 = arith.constant 0 : index
    %c0_6 = arith.constant 0 : index
    %5 = vector.load %arg3[%c0_4, %c1, %c0_5, %c0_6] : memref<1x3x2x128xf32, #tpu.memory_space<vmem>>, vector<1x1x2x128xf32>
    %6 = vector.shape_cast %5 : vector<1x1x2x128xf32> to vector<2x128xf32>
    %c0_7 = arith.constant 0 : index
    %c2 = arith.constant 2 : index
    %c0_8 = arith.constant 0 : index
    %c0_9 = arith.constant 0 : index
    %7 = vector.load %arg3[%c0_7, %c2, %c0_8, %c0_9] : memref<1x3x2x128xf32, #tpu.memory_space<vmem>>, vector<1x1x2x128xf32>
    %8 = vector.shape_cast %7 : vector<1x1x2x128xf32> to vector<2x128xf32>
    %cst = arith.constant 4.045000e-02 : f32
    %9 = vector.broadcast %cst : f32 to vector<2x128xf32>
    %10 = arith.cmpf ogt, %4, %9 : vector<2x128xf32>
    %cst_10 = arith.constant 5.500000e-02 : f32
    %11 = vector.broadcast %cst_10 : f32 to vector<2x128xf32>
    %12 = arith.addf %4, %11 : vector<2x128xf32>
    %cst_11 = arith.constant 0.947867274 : f32
    %13 = vector.broadcast %cst_11 : f32 to vector<2x128xf32>
    %14 = arith.mulf %12, %13 : vector<2x128xf32>
    %cst_12 = arith.constant 2.400000e+00 : f32
    %15 = vector.broadcast %cst_12 : f32 to vector<2x128xf32>
    %16 = math.powf %14, %15 : vector<2x128xf32>
    %cst_13 = arith.constant 0.0773993805 : f32
    %17 = vector.broadcast %cst_13 : f32 to vector<2x128xf32>
    %18 = arith.mulf %4, %17 : vector<2x128xf32>
    %19 = arith.select %10, %16, %18 : vector<2x128xi1>, vector<2x128xf32>
    %cst_14 = arith.constant 4.045000e-02 : f32
    %20 = vector.broadcast %cst_14 : f32 to vector<2x128xf32>
    %21 = arith.cmpf ogt, %6, %20 : vector<2x128xf32>
    %cst_15 = arith.constant 5.500000e-02 : f32
    %22 = vector.broadcast %cst_15 : f32 to vector<2x128xf32>
    %23 = arith.addf %6, %22 : vector<2x128xf32>
    %cst_16 = arith.constant 0.947867274 : f32
    %24 = vector.broadcast %cst_16 : f32 to vector<2x128xf32>
    %25 = arith.mulf %23, %24 : vector<2x128xf32>
    %cst_17 = arith.constant 2.400000e+00 : f32
    %26 = vector.broadcast %cst_17 : f32 to vector<2x128xf32>
    %27 = math.powf %25, %26 : vector<2x128xf32>
    %cst_18 = arith.constant 0.0773993805 : f32
    %28 = vector.broadcast %cst_18 : f32 to vector<2x128xf32>
    %29 = arith.mulf %6, %28 : vector<2x128xf32>
    %30 = arith.select %21, %27, %29 : vector<2x128xi1>, vector<2x128xf32>
    %cst_19 = arith.constant 4.045000e-02 : f32
    %31 = vector.broadcast %cst_19 : f32 to vector<2x128xf32>
    %32 = arith.cmpf ogt, %8, %31 : vector<2x128xf32>
    %cst_20 = arith.constant 5.500000e-02 : f32
    %33 = vector.broadcast %cst_20 : f32 to vector<2x128xf32>
    %34 = arith.addf %8, %33 : vector<2x128xf32>
    %cst_21 = arith.constant 0.947867274 : f32
    %35 = vector.broadcast %cst_21 : f32 to vector<2x128xf32>
    %36 = arith.mulf %34, %35 : vector<2x128xf32>
    %cst_22 = arith.constant 2.400000e+00 : f32
    %37 = vector.broadcast %cst_22 : f32 to vector<2x128xf32>
    %38 = math.powf %36, %37 : vector<2x128xf32>
    %cst_23 = arith.constant 0.0773993805 : f32
    %39 = vector.broadcast %cst_23 : f32 to vector<2x128xf32>
    %40 = arith.mulf %8, %39 : vector<2x128xf32>
    %41 = arith.select %32, %38, %40 : vector<2x128xi1>, vector<2x128xf32>
    %cst_24 = arith.constant 4.124530e-01 : f32
    %42 = vector.broadcast %cst_24 : f32 to vector<2x128xf32>
    %43 = arith.mulf %42, %19 : vector<2x128xf32>
    %cst_25 = arith.constant 3.575800e-01 : f32
    %44 = vector.broadcast %cst_25 : f32 to vector<2x128xf32>
    %45 = arith.mulf %44, %30 : vector<2x128xf32>
    %46 = arith.addf %43, %45 : vector<2x128xf32>
    %cst_26 = arith.constant 1.804230e-01 : f32
    %47 = vector.broadcast %cst_26 : f32 to vector<2x128xf32>
    %48 = arith.mulf %47, %41 : vector<2x128xf32>
    %49 = arith.addf %46, %48 : vector<2x128xf32>
    %cst_27 = arith.constant 1.05211103 : f32
    %50 = vector.broadcast %cst_27 : f32 to vector<2x128xf32>
    %51 = arith.mulf %49, %50 : vector<2x128xf32>
    %cst_28 = arith.constant 2.126710e-01 : f32
    %52 = vector.broadcast %cst_28 : f32 to vector<2x128xf32>
    %53 = arith.mulf %52, %19 : vector<2x128xf32>
    %cst_29 = arith.constant 7.151600e-01 : f32
    %54 = vector.broadcast %cst_29 : f32 to vector<2x128xf32>
    %55 = arith.mulf %54, %30 : vector<2x128xf32>
    %56 = arith.addf %53, %55 : vector<2x128xf32>
    %cst_30 = arith.constant 7.216900e-02 : f32
    %57 = vector.broadcast %cst_30 : f32 to vector<2x128xf32>
    %58 = arith.mulf %57, %41 : vector<2x128xf32>
    %59 = arith.addf %56, %58 : vector<2x128xf32>
    %cst_31 = arith.constant 1.933400e-02 : f32
    %60 = vector.broadcast %cst_31 : f32 to vector<2x128xf32>
    %61 = arith.mulf %60, %19 : vector<2x128xf32>
    %cst_32 = arith.constant 1.191930e-01 : f32
    %62 = vector.broadcast %cst_32 : f32 to vector<2x128xf32>
    %63 = arith.mulf %62, %30 : vector<2x128xf32>
    %64 = arith.addf %61, %63 : vector<2x128xf32>
    %cst_33 = arith.constant 9.502270e-01 : f32
    %65 = vector.broadcast %cst_33 : f32 to vector<2x128xf32>
    %66 = arith.mulf %65, %41 : vector<2x128xf32>
    %67 = arith.addf %64, %66 : vector<2x128xf32>
    %cst_34 = arith.constant 0.918417036 : f32
    %68 = vector.broadcast %cst_34 : f32 to vector<2x128xf32>
    %69 = arith.mulf %67, %68 : vector<2x128xf32>
    %cst_35 = arith.constant 8.856000e-03 : f32
    %70 = vector.broadcast %cst_35 : f32 to vector<2x128xf32>
    %71 = arith.cmpf ogt, %51, %70 : vector<2x128xf32>
    %cst_36 = arith.constant 0.333333343 : f32
    %72 = vector.broadcast %cst_36 : f32 to vector<2x128xf32>
    %73 = math.powf %51, %72 : vector<2x128xf32>
    %cst_37 = arith.constant 7.787000e+00 : f32
    %74 = vector.broadcast %cst_37 : f32 to vector<2x128xf32>
    %75 = arith.mulf %74, %51 : vector<2x128xf32>
    %cst_38 = arith.constant 0.137931034 : f32
    %76 = vector.broadcast %cst_38 : f32 to vector<2x128xf32>
    %77 = arith.addf %75, %76 : vector<2x128xf32>
    %78 = arith.select %71, %73, %77 : vector<2x128xi1>, vector<2x128xf32>
    %cst_39 = arith.constant 8.856000e-03 : f32
    %79 = vector.broadcast %cst_39 : f32 to vector<2x128xf32>
    %80 = arith.cmpf ogt, %59, %79 : vector<2x128xf32>
    %cst_40 = arith.constant 0.333333343 : f32
    %81 = vector.broadcast %cst_40 : f32 to vector<2x128xf32>
    %82 = math.powf %59, %81 : vector<2x128xf32>
    %cst_41 = arith.constant 7.787000e+00 : f32
    %83 = vector.broadcast %cst_41 : f32 to vector<2x128xf32>
    %84 = arith.mulf %83, %59 : vector<2x128xf32>
    %cst_42 = arith.constant 0.137931034 : f32
    %85 = vector.broadcast %cst_42 : f32 to vector<2x128xf32>
    %86 = arith.addf %84, %85 : vector<2x128xf32>
    %87 = arith.select %80, %82, %86 : vector<2x128xi1>, vector<2x128xf32>
    %cst_43 = arith.constant 8.856000e-03 : f32
    %88 = vector.broadcast %cst_43 : f32 to vector<2x128xf32>
    %89 = arith.cmpf ogt, %69, %88 : vector<2x128xf32>
    %cst_44 = arith.constant 0.333333343 : f32
    %90 = vector.broadcast %cst_44 : f32 to vector<2x128xf32>
    %91 = math.powf %69, %90 : vector<2x128xf32>
    %cst_45 = arith.constant 7.787000e+00 : f32
    %92 = vector.broadcast %cst_45 : f32 to vector<2x128xf32>
    %93 = arith.mulf %92, %69 : vector<2x128xf32>
    %cst_46 = arith.constant 0.137931034 : f32
    %94 = vector.broadcast %cst_46 : f32 to vector<2x128xf32>
    %95 = arith.addf %93, %94 : vector<2x128xf32>
    %96 = arith.select %89, %91, %95 : vector<2x128xi1>, vector<2x128xf32>
    %c0_47 = arith.constant 0 : index
    %c0_48 = arith.constant 0 : index
    %c0_49 = arith.constant 0 : index
    %c0_50 = arith.constant 0 : index
    %97 = vector.load %arg4[%c0_47, %c0_48, %c0_49, %c0_50] : memref<1x3x2x128xf32, #tpu.memory_space<vmem>>, vector<1x1x2x128xf32>
    %98 = vector.shape_cast %97 : vector<1x1x2x128xf32> to vector<2x128xf32>
    %c0_51 = arith.constant 0 : index
    %c1_52 = arith.constant 1 : index
    %c0_53 = arith.constant 0 : index
    %c0_54 = arith.constant 0 : index
    %99 = vector.load %arg4[%c0_51, %c1_52, %c0_53, %c0_54] : memref<1x3x2x128xf32, #tpu.memory_space<vmem>>, vector<1x1x2x128xf32>
    %100 = vector.shape_cast %99 : vector<1x1x2x128xf32> to vector<2x128xf32>
    %c0_55 = arith.constant 0 : index
    %c2_56 = arith.constant 2 : index
    %c0_57 = arith.constant 0 : index
    %c0_58 = arith.constant 0 : index
    %101 = vector.load %arg4[%c0_55, %c2_56, %c0_57, %c0_58] : memref<1x3x2x128xf32, #tpu.memory_space<vmem>>, vector<1x1x2x128xf32>
    %102 = vector.shape_cast %101 : vector<1x1x2x128xf32> to vector<2x128xf32>
    %cst_59 = arith.constant 4.045000e-02 : f32
    %103 = vector.broadcast %cst_59 : f32 to vector<2x128xf32>
    %104 = arith.cmpf ogt, %98, %103 : vector<2x128xf32>
    %cst_60 = arith.constant 5.500000e-02 : f32
    %105 = vector.broadcast %cst_60 : f32 to vector<2x128xf32>
    %106 = arith.addf %98, %105 : vector<2x128xf32>
    %cst_61 = arith.constant 0.947867274 : f32
    %107 = vector.broadcast %cst_61 : f32 to vector<2x128xf32>
    %108 = arith.mulf %106, %107 : vector<2x128xf32>
    %cst_62 = arith.constant 2.400000e+00 : f32
    %109 = vector.broadcast %cst_62 : f32 to vector<2x128xf32>
    %110 = math.powf %108, %109 : vector<2x128xf32>
    %cst_63 = arith.constant 0.0773993805 : f32
    %111 = vector.broadcast %cst_63 : f32 to vector<2x128xf32>
    %112 = arith.mulf %98, %111 : vector<2x128xf32>
    %113 = arith.select %104, %110, %112 : vector<2x128xi1>, vector<2x128xf32>
    %cst_64 = arith.constant 4.045000e-02 : f32
    %114 = vector.broadcast %cst_64 : f32 to vector<2x128xf32>
    %115 = arith.cmpf ogt, %100, %114 : vector<2x128xf32>
    %cst_65 = arith.constant 5.500000e-02 : f32
    %116 = vector.broadcast %cst_65 : f32 to vector<2x128xf32>
    %117 = arith.addf %100, %116 : vector<2x128xf32>
    %cst_66 = arith.constant 0.947867274 : f32
    %118 = vector.broadcast %cst_66 : f32 to vector<2x128xf32>
    %119 = arith.mulf %117, %118 : vector<2x128xf32>
    %cst_67 = arith.constant 2.400000e+00 : f32
    %120 = vector.broadcast %cst_67 : f32 to vector<2x128xf32>
    %121 = math.powf %119, %120 : vector<2x128xf32>
    %cst_68 = arith.constant 0.0773993805 : f32
    %122 = vector.broadcast %cst_68 : f32 to vector<2x128xf32>
    %123 = arith.mulf %100, %122 : vector<2x128xf32>
    %124 = arith.select %115, %121, %123 : vector<2x128xi1>, vector<2x128xf32>
    %cst_69 = arith.constant 4.045000e-02 : f32
    %125 = vector.broadcast %cst_69 : f32 to vector<2x128xf32>
    %126 = arith.cmpf ogt, %102, %125 : vector<2x128xf32>
    %cst_70 = arith.constant 5.500000e-02 : f32
    %127 = vector.broadcast %cst_70 : f32 to vector<2x128xf32>
    %128 = arith.addf %102, %127 : vector<2x128xf32>
    %cst_71 = arith.constant 0.947867274 : f32
    %129 = vector.broadcast %cst_71 : f32 to vector<2x128xf32>
    %130 = arith.mulf %128, %129 : vector<2x128xf32>
    %cst_72 = arith.constant 2.400000e+00 : f32
    %131 = vector.broadcast %cst_72 : f32 to vector<2x128xf32>
    %132 = math.powf %130, %131 : vector<2x128xf32>
    %cst_73 = arith.constant 0.0773993805 : f32
    %133 = vector.broadcast %cst_73 : f32 to vector<2x128xf32>
    %134 = arith.mulf %102, %133 : vector<2x128xf32>
    %135 = arith.select %126, %132, %134 : vector<2x128xi1>, vector<2x128xf32>
    %cst_74 = arith.constant 4.124530e-01 : f32
    %136 = vector.broadcast %cst_74 : f32 to vector<2x128xf32>
    %137 = arith.mulf %136, %113 : vector<2x128xf32>
    %cst_75 = arith.constant 3.575800e-01 : f32
    %138 = vector.broadcast %cst_75 : f32 to vector<2x128xf32>
    %139 = arith.mulf %138, %124 : vector<2x128xf32>
    %140 = arith.addf %137, %139 : vector<2x128xf32>
    %cst_76 = arith.constant 1.804230e-01 : f32
    %141 = vector.broadcast %cst_76 : f32 to vector<2x128xf32>
    %142 = arith.mulf %141, %135 : vector<2x128xf32>
    %143 = arith.addf %140, %142 : vector<2x128xf32>
    %cst_77 = arith.constant 1.05211103 : f32
    %144 = vector.broadcast %cst_77 : f32 to vector<2x128xf32>
    %145 = arith.mulf %143, %144 : vector<2x128xf32>
    %cst_78 = arith.constant 2.126710e-01 : f32
    %146 = vector.broadcast %cst_78 : f32 to vector<2x128xf32>
    %147 = arith.mulf %146, %113 : vector<2x128xf32>
    %cst_79 = arith.constant 7.151600e-01 : f32
    %148 = vector.broadcast %cst_79 : f32 to vector<2x128xf32>
    %149 = arith.mulf %148, %124 : vector<2x128xf32>
    %150 = arith.addf %147, %149 : vector<2x128xf32>
    %cst_80 = arith.constant 7.216900e-02 : f32
    %151 = vector.broadcast %cst_80 : f32 to vector<2x128xf32>
    %152 = arith.mulf %151, %135 : vector<2x128xf32>
    %153 = arith.addf %150, %152 : vector<2x128xf32>
    %cst_81 = arith.constant 1.933400e-02 : f32
    %154 = vector.broadcast %cst_81 : f32 to vector<2x128xf32>
    %155 = arith.mulf %154, %113 : vector<2x128xf32>
    %cst_82 = arith.constant 1.191930e-01 : f32
    %156 = vector.broadcast %cst_82 : f32 to vector<2x128xf32>
    %157 = arith.mulf %156, %124 : vector<2x128xf32>
    %158 = arith.addf %155, %157 : vector<2x128xf32>
    %cst_83 = arith.constant 9.502270e-01 : f32
    %159 = vector.broadcast %cst_83 : f32 to vector<2x128xf32>
    %160 = arith.mulf %159, %135 : vector<2x128xf32>
    %161 = arith.addf %158, %160 : vector<2x128xf32>
    %cst_84 = arith.constant 0.918417036 : f32
    %162 = vector.broadcast %cst_84 : f32 to vector<2x128xf32>
    %163 = arith.mulf %161, %162 : vector<2x128xf32>
    %cst_85 = arith.constant 8.856000e-03 : f32
    %164 = vector.broadcast %cst_85 : f32 to vector<2x128xf32>
    %165 = arith.cmpf ogt, %145, %164 : vector<2x128xf32>
    %cst_86 = arith.constant 0.333333343 : f32
    %166 = vector.broadcast %cst_86 : f32 to vector<2x128xf32>
    %167 = math.powf %145, %166 : vector<2x128xf32>
    %cst_87 = arith.constant 7.787000e+00 : f32
    %168 = vector.broadcast %cst_87 : f32 to vector<2x128xf32>
    %169 = arith.mulf %168, %145 : vector<2x128xf32>
    %cst_88 = arith.constant 0.137931034 : f32
    %170 = vector.broadcast %cst_88 : f32 to vector<2x128xf32>
    %171 = arith.addf %169, %170 : vector<2x128xf32>
    %172 = arith.select %165, %167, %171 : vector<2x128xi1>, vector<2x128xf32>
    %cst_89 = arith.constant 8.856000e-03 : f32
    %173 = vector.broadcast %cst_89 : f32 to vector<2x128xf32>
    %174 = arith.cmpf ogt, %153, %173 : vector<2x128xf32>
    %cst_90 = arith.constant 0.333333343 : f32
    %175 = vector.broadcast %cst_90 : f32 to vector<2x128xf32>
    %176 = math.powf %153, %175 : vector<2x128xf32>
    %cst_91 = arith.constant 7.787000e+00 : f32
    %177 = vector.broadcast %cst_91 : f32 to vector<2x128xf32>
    %178 = arith.mulf %177, %153 : vector<2x128xf32>
    %cst_92 = arith.constant 0.137931034 : f32
    %179 = vector.broadcast %cst_92 : f32 to vector<2x128xf32>
    %180 = arith.addf %178, %179 : vector<2x128xf32>
    %181 = arith.select %174, %176, %180 : vector<2x128xi1>, vector<2x128xf32>
    %cst_93 = arith.constant 8.856000e-03 : f32
    %182 = vector.broadcast %cst_93 : f32 to vector<2x128xf32>
    %183 = arith.cmpf ogt, %163, %182 : vector<2x128xf32>
    %cst_94 = arith.constant 0.333333343 : f32
    %184 = vector.broadcast %cst_94 : f32 to vector<2x128xf32>
    %185 = math.powf %163, %184 : vector<2x128xf32>
    %cst_95 = arith.constant 7.787000e+00 : f32
    %186 = vector.broadcast %cst_95 : f32 to vector<2x128xf32>
    %187 = arith.mulf %186, %163 : vector<2x128xf32>
    %cst_96 = arith.constant 0.137931034 : f32
    %188 = vector.broadcast %cst_96 : f32 to vector<2x128xf32>
    %189 = arith.addf %187, %188 : vector<2x128xf32>
    %190 = arith.select %183, %185, %189 : vector<2x128xi1>, vector<2x128xf32>
    %191 = arith.subf %78, %87 : vector<2x128xf32>
    %192 = arith.subf %172, %181 : vector<2x128xf32>
    %193 = arith.subf %191, %192 : vector<2x128xf32>
    %194 = math.absf %193 : vector<2x128xf32>
    %cst_97 = arith.constant 5.000000e+02 : f32
    %195 = vector.broadcast %cst_97 : f32 to vector<2x128xf32>
    %196 = arith.mulf %195, %194 : vector<2x128xf32>
    %197 = arith.subf %87, %96 : vector<2x128xf32>
    %198 = arith.subf %181, %190 : vector<2x128xf32>
    %199 = arith.subf %197, %198 : vector<2x128xf32>
    %200 = math.absf %199 : vector<2x128xf32>
    %cst_98 = arith.constant 2.000000e+02 : f32
    %201 = vector.broadcast %cst_98 : f32 to vector<2x128xf32>
    %202 = arith.mulf %201, %200 : vector<2x128xf32>
    %203 = arith.addf %196, %202 : vector<2x128xf32>
    %cst_99 = arith.constant 5.000000e-01 : f32
    %204 = vector.broadcast %cst_99 : f32 to vector<2x128xf32>
    %205 = arith.mulf %203, %204 : vector<2x128xf32>
    %c0_100 = arith.constant 0 : index
    %c0_101 = arith.constant 0 : index
    %c0_102 = arith.constant 0 : index
    %206 = vector.load %arg5[%c0_100, %c0_101, %c0_102] : memref<1x2x128xf32, #tpu.memory_space<vmem>>, vector<1x2x128xf32>
    %207 = vector.shape_cast %206 : vector<1x2x128xf32> to vector<2x128xf32>
    %c0_103 = arith.constant 0 : index
    %c0_104 = arith.constant 0 : index
    %c0_105 = arith.constant 0 : index
    %208 = vector.load %arg6[%c0_103, %c0_104, %c0_105] : memref<1x8x128xf32, #tpu.memory_space<vmem>>, vector<1x8x128xf32>
    %209 = vector.shape_cast %208 : vector<1x8x128xf32> to vector<8x128xf32>
    %210 = arith.mulf %205, %207 : vector<2x128xf32>
    %cst_106 = arith.constant dense<0.000000e+00> : vector<128xf32>
    %211 = vector.multi_reduction <add>, %210, %cst_106 [0] : vector<2x128xf32> to vector<128xf32>
    %212 = vector.shape_cast %211 : vector<128xf32> to vector<1x128xf32>
    %213 = tpu.iota {dimensions = array<i32: 0>} : vector<8x128xi32>
    %c0_i32_107 = arith.constant 0 : i32
    %214 = vector.broadcast %c0_i32_107 : i32 to vector<8x128xi32>
    %215 = arith.cmpi eq, %213, %214 : vector<8x128xi32>
    %216 = vector.shape_cast %212 : vector<1x128xf32> to vector<1x128xf32>
    %217 = vector.broadcast %216 : vector<1x128xf32> to vector<8x128xf32>
    %cst_108 = arith.constant 0.000000e+00 : f32
    %218 = vector.broadcast %cst_108 : f32 to vector<8x128xf32>
    %219 = arith.select %215, %217, %218 : vector<8x128xi1>, vector<8x128xf32>
    %220 = arith.addf %209, %219 : vector<8x128xf32>
    %c0_109 = arith.constant 0 : index
    %c0_110 = arith.constant 0 : index
    %c0_111 = arith.constant 0 : index
    %221 = vector.load %arg6[%c0_109, %c0_110, %c0_111] : memref<1x8x128xf32, #tpu.memory_space<vmem>>, vector<1x8x128xf32>
    %222 = vector.shape_cast %221 : vector<1x8x128xf32> to vector<8x128xf32>
    %223 = vector.shape_cast %220 : vector<8x128xf32> to vector<1x8x128xf32>
    tpu.vector_store %arg6[%c0_109, %c0_110, %c0_111], %223 {strides = array<i32>} : memref<1x8x128xf32, #tpu.memory_space<vmem>>, vector<1x8x128xf32>,
    %c0_112 = arith.constant 0 : index
    %c0_113 = arith.constant 0 : index
    %c0_114 = arith.constant 0 : index
    %224 = vector.load %arg7[%c0_112, %c0_113, %c0_114] : memref<1x8x128xf32, #tpu.memory_space<vmem>>, vector<1x8x128xf32>
    %225 = vector.shape_cast %224 : vector<1x8x128xf32> to vector<8x128xf32>
    %cst_115 = arith.constant dense<0.000000e+00> : vector<128xf32>
    %226 = vector.multi_reduction <add>, %207, %cst_115 [0] : vector<2x128xf32> to vector<128xf32>
    %227 = vector.shape_cast %226 : vector<128xf32> to vector<1x128xf32>
    %228 = tpu.iota {dimensions = array<i32: 0>} : vector<8x128xi32>
    %c0_i32_116 = arith.constant 0 : i32
    %229 = vector.broadcast %c0_i32_116 : i32 to vector<8x128xi32>
    %230 = arith.cmpi eq, %228, %229 : vector<8x128xi32>
    %231 = vector.shape_cast %227 : vector<1x128xf32> to vector<1x128xf32>
    %232 = vector.broadcast %231 : vector<1x128xf32> to vector<8x128xf32>
    %cst_117 = arith.constant 0.000000e+00 : f32
    %233 = vector.broadcast %cst_117 : f32 to vector<8x128xf32>
    %234 = arith.select %230, %232, %233 : vector<8x128xi1>, vector<8x128xf32>
    %235 = arith.addf %225, %234 : vector<8x128xf32>
    %c0_118 = arith.constant 0 : index
    %c0_119 = arith.constant 0 : index
    %c0_120 = arith.constant 0 : index
    %236 = vector.load %arg7[%c0_118, %c0_119, %c0_120] : memref<1x8x128xf32, #tpu.memory_space<vmem>>, vector<1x8x128xf32>
    %237 = vector.shape_cast %236 : vector<1x8x128xf32> to vector<8x128xf32>
    %238 = vector.shape_cast %235 : vector<8x128xf32> to vector<1x8x128xf32>
    tpu.vector_store %arg7[%c0_118, %c0_119, %c0_120], %238 {strides = array<i32>} : memref<1x8x128xf32, #tpu.memory_space<vmem>>, vector<1x8x128xf32>,
    return
  }
  func.func @transform_0(%arg0: i32, %arg1: i32, %arg2: i32) -> (i32, i32, i32, i32) {
    %c1_i32 = arith.constant 1 : i32
    %0 = arith.muli %arg1, %c1_i32 : i32
    %1 = arith.addi %0, %arg2 : i32
    %c0_i32 = arith.constant 0 : i32
    %c0_i32_0 = arith.constant 0 : i32
    %c0_i32_1 = arith.constant 0 : i32
    return %arg0, %c0_i32, %1, %c0_i32_0 : i32, i32, i32, i32
  }
  func.func @transform_1(%arg0: i32, %arg1: i32, %arg2: i32) -> (i32, i32, i32, i32) {
    %c1_i32 = arith.constant 1 : i32
    %0 = arith.muli %arg1, %c1_i32 : i32
    %1 = arith.addi %0, %arg2 : i32
    %c0_i32 = arith.constant 0 : i32
    %c0_i32_0 = arith.constant 0 : i32
    %c0_i32_1 = arith.constant 0 : i32
    return %arg0, %c0_i32, %1, %c0_i32_0 : i32, i32, i32, i32
  }
  func.func @transform_2(%arg0: i32, %arg1: i32, %arg2: i32) -> (i32, i32, i32) {
    %c1_i32 = arith.constant 1 : i32
    %0 = arith.muli %arg1, %c1_i32 : i32
    %1 = arith.addi %0, %arg2 : i32
    %c0_i32 = arith.constant 0 : i32
    %c0_i32_0 = arith.constant 0 : i32
    return %arg0, %1, %c0_i32 : i32, i32, i32
  }
  func.func @transform_3(%arg0: i32, %arg1: i32, %arg2: i32) -> (i32, i32, i32) {
    %c1_i32 = arith.constant 1 : i32
    %0 = arith.muli %arg0, %c1_i32 : i32
    %1 = arith.addi %0, %arg1 : i32
    %c0_i32 = arith.constant 0 : i32
    %c0_i32_0 = arith.constant 0 : i32
    %c0_i32_1 = arith.constant 0 : i32
    return %1, %c0_i32, %c0_i32_0 : i32, i32, i32
  }
  func.func @transform_4(%arg0: i32, %arg1: i32, %arg2: i32) -> (i32, i32, i32) {
    %c1_i32 = arith.constant 1 : i32
    %0 = arith.muli %arg0, %c1_i32 : i32
    %1 = arith.addi %0, %arg1 : i32
    %c0_i32 = arith.constant 0 : i32
    %c0_i32_0 = arith.constant 0 : i32
    %c0_i32_1 = arith.constant 0 : i32
    return %1, %c0_i32, %c0_i32_0 : i32, i32, i32
  }
}

</mosaic_0001>

<llo_original>
// kernel: tpu_custom_call.1
$region0: #{tpu_custom_call.1}
  #allocation0 [shape = 'u32[]', space=smem, size = 0x4, offset = 0x4, fixed_abs, tag = 'smem constant byte address 0x4 - core index']
  #allocation1 [shape = 'u32[72,128]{1,0:T(1,128)}', space=vmem, size = 0x9000, scoped, tag = 'internal scratch']
  %s0 = inlined_call_operand.hbm [shape: f32[2,3,2,128], index: 0, kind: input, shape index: {}]
  %s1 = inlined_call_operand.hbm [shape: f32[2,3,2,128], index: 1, kind: input, shape index: {}]
  %s2 = inlined_call_operand.hbm [shape: f32[2,2,128], index: 2, kind: input, shape index: {}]
  %s3 = inlined_call_operand.hbm [shape: f32[2,8,128], index: 3, kind: output, shape index: {0}]
  %s4 = inlined_call_operand.hbm [shape: f32[2,8,128], index: 4, kind: output, shape index: {1}]
  %5 = xla_tuple %s3, %s4
  %s6 = sld [smem:[#allocation0]]
  $region69: #{tpu_custom_call.1} parent=0
    _
  %s8 = ssub.s32 1, %s6
  %s9 = scalar_select 0, %s8, %s6
  $region1: #{tpu_custom_call.1} parent=0
    #allocation2 [shape = 'u8[6144]{0}', space=vmem, size = 0x1800, scoped, tag = 'input window, operand 0']
    #allocation3 [shape = 's32[2]{0}', space=sflag, size = 0x8, scoped, tag = 'scoped memory for tpu_custom_call.1']
    #allocation4 [shape = 's32[2]{0}', space=sflag, size = 0x8, scoped, tag = 'scoped memory for tpu_custom_call.1']
    #allocation5 [shape = 'u8[6144]{0}', space=vmem, size = 0x1800, scoped, tag = 'input window, operand 1']
    #allocation6 [shape = 's32[2]{0}', space=sflag, size = 0x8, scoped, tag = 'scoped memory for tpu_custom_call.1']
    #allocation7 [shape = 'u8[2048]{0}', space=vmem, size = 0x800, scoped, tag = 'input window, operand 2']
    #allocation8 [shape = 'u8[8192]{0}', space=vmem, size = 0x2000, scoped, tag = 'output window, operand 0']
    #allocation9 [shape = 'u8[8192]{0}', space=vmem, size = 0x2000, scoped, tag = 'output window, operand 1']
    #allocation10 [shape = 's32[2]{0}', space=sflag, size = 0x8, scoped, tag = 'scoped memory for tpu_custom_call.1']
    %10 = vsyncpa [#allocation3], 0
    %s11 = scalar_lea.sflag [#allocation3], 1
    %12 = vsyncpa %s11, 0
    %13 = vsyncpa [#allocation6], 0
    %s14 = scalar_lea.sflag [#allocation6], 1
    %15 = vsyncpa %s14, 0
    %16 = vsyncpa [#allocation4], 0
    %s17 = scalar_lea.sflag [#allocation4], 1
    %18 = vsyncpa %s17, 0
    %19 = vsyncpa [#allocation10], 0
    %s20 = scalar_lea.sflag [#allocation10], 1
    %21 = vsyncpa %s20, 0
    loop: start=0, step=1, limit=4
    $region2: #{tpu_custom_call.1} parent=1 // loop_pre_header
      _
    $region3: #{tpu_custom_call.1} parent=1 // loop_header
      %s23 = sphi 0, %s27
      %p24 = scmp.ge.s32.totalorder %s23, 4
      %s30 = sphi 0, %s49
      %s31 = sphi 0, %s45
      %s32 = sphi 0, %s41
      %s33 = sphi 0, %s30
      %s34 = sphi 0, %s31
      %s35 = sphi 0, %s32
      %s36 = sphi 0, %s33
      %s37 = sphi 0, %s34
      %s38 = sphi 0, %s35
      %s56 = sphi 0, %s58
      %s59 = sphi 0, %s56
      %s60 = sphi 0, %s59
      %s76 = sphi 0, %s60
      %s86 = sphi 0, %s88
      %s89 = sphi 0, %s86
      %s90 = sphi 0, %s89
      %s106 = sphi 0, %s90
      %s116 = sphi 0, %s118
      %s119 = sphi 0, %s116
      %s120 = sphi 0, %s119
      %s136 = sphi 0, %s120
      %s144 = sphi 0, %s146
      %s147 = sphi 0, %s144
      %s148 = sphi 0, %s147
      %s164 = sphi 0, %s148
      %s172 = sphi 0, %s174
      %s175 = sphi 0, %s172
      %s176 = sphi 0, %s175
      %s192 = sphi 0, %s176
    $region4: #{tpu_custom_call.1} parent=1 // loop_header_branch
      %26 = sbr.rel (%p24) target = $region8
    $region5: #{tpu_custom_call.1} parent=1 // loop_body
      %s28 = ssub.s32 %s23, 1
      %s29 = ssub.s32 %s23, 2
      %s39 = sadd.s32 1, %s32
      %p40 = scmp.ge.s32.totalorder %s39, 1
      %s41 = scalar_select %p40, 0, %s39
      %s42 = sadd.s32 1, %s31
      %s43 = scalar_select %p40, %s42, %s31
      %p44 = scmp.ge.s32.totalorder %s43, 1
      %s45 = scalar_select %p44, 0, %s43
      %s46 = sadd.s32 1, %s30
      %s47 = scalar_select %p44, %s46, %s30
      %p48 = scmp.ge.s32.totalorder %s47, 2
      %s49 = scalar_select %p48, 0, %s47
      %s50 = sadd.s32 %s31, %s32
      %s51 = sadd.s32 %s45, %s41
      %s52 = ssub.s32 %s30, %s49
      %s53 = ssub.s32 %s50, %s51
      %s54 = sor.u32 %s52, %s53
      %p55 = scmp.eq.s32.totalorder %s54, 0
      %s57 = sadd.s32 %s56, 1
      %s58 = scalar_select %p55, %s56, %s57
      %p61 = pneg %p55
      %p62 = scmp.eq.s32.totalorder %s23, 1
      %p63 = por %p61, %p62
      %p64 = scmp.ne.s32.totalorder %s56, %s59
      %p65 = scmp.eq.s32.totalorder %s23, 0
      %p66 = por %p64, %p65
      %p67 = scmp.ne.s32.totalorder %s56, %s59
      %p68 = scmp.eq.s32.totalorder %s28, 1
      %p69 = por %p67, %p68
      %p70 = scmp.ne.s32.totalorder %s59, %s60
      %p71 = scmp.eq.s32.totalorder %s28, 0
      %p72 = por %p70, %p71
      %p73 = scmp.ne.s32.totalorder %s59, %s60
      %p74 = scmp.eq.s32.totalorder %s29, 1
      %p75 = por %p73, %p74
      %p77 = scmp.ne.s32.totalorder %s60, %s76
      %p78 = scmp.eq.s32.totalorder %s29, 0
      %p79 = por %p77, %p78
      %s80 = sadd.s32 %s31, %s32
      %s81 = sadd.s32 %s45, %s41
      %s82 = ssub.s32 %s30, %s49
      %s83 = ssub.s32 %s80, %s81
      %s84 = sor.u32 %s82, %s83
      %p85 = scmp.eq.s32.totalorder %s84, 0
      %s87 = sadd.s32 %s86, 1
      %s88 = scalar_select %p85, %s86, %s87
      %p91 = pneg %p85
      %p92 = scmp.eq.s32.totalorder %s23, 1
      %p93 = por %p91, %p92
      %p94 = scmp.ne.s32.totalorder %s86, %s89
      %p95 = scmp.eq.s32.totalorder %s23, 0
      %p96 = por %p94, %p95
      %p97 = scmp.ne.s32.totalorder %s86, %s89
      %p98 = scmp.eq.s32.totalorder %s28, 1
      %p99 = por %p97, %p98
      %p100 = scmp.ne.s32.totalorder %s89, %s90
      %p101 = scmp.eq.s32.totalorder %s28, 0
      %p102 = por %p100, %p101
      %p103 = scmp.ne.s32.totalorder %s89, %s90
      %p104 = scmp.eq.s32.totalorder %s29, 1
      %p105 = por %p103, %p104
      %p107 = scmp.ne.s32.totalorder %s90, %s106
      %p108 = scmp.eq.s32.totalorder %s29, 0
      %p109 = por %p107, %p108
      %s110 = sadd.s32 %s31, %s32
      %s111 = sadd.s32 %s45, %s41
      %s112 = ssub.s32 %s30, %s49
      %s113 = ssub.s32 %s110, %s111
      %s114 = sor.u32 %s112, %s113
      %p115 = scmp.eq.s32.totalorder %s114, 0
      %s117 = sadd.s32 %s116, 1
      %s118 = scalar_select %p115, %s116, %s117
      %p121 = pneg %p115
      %p122 = scmp.eq.s32.totalorder %s23, 1
      %p123 = por %p121, %p122
      %p124 = scmp.ne.s32.totalorder %s116, %s119
      %p125 = scmp.eq.s32.totalorder %s23, 0
      %p126 = por %p124, %p125
      %p127 = scmp.ne.s32.totalorder %s116, %s119
      %p128 = scmp.eq.s32.totalorder %s28, 1
      %p129 = por %p127, %p128
      %p130 = scmp.ne.s32.totalorder %s119, %s120
      %p131 = scmp.eq.s32.totalorder %s28, 0
      %p132 = por %p130, %p131
      %p133 = scmp.ne.s32.totalorder %s119, %s120
      %p134 = scmp.eq.s32.totalorder %s29, 1
      %p135 = por %p133, %p134
      %p137 = scmp.ne.s32.totalorder %s120, %s136
      %p138 = scmp.eq.s32.totalorder %s29, 0
      %p139 = por %p137, %p138
      %s140 = sadd.s32 %s30, %s31
      %s141 = sadd.s32 %s49, %s45
      %s142 = ssub.s32 %s140, %s141
      %p143 = scmp.eq.s32.totalorder %s142, 0
      %s145 = sadd.s32 %s144, 1
      %s146 = scalar_select %p143, %s144, %s145
      %p149 = pneg %p143
      %p150 = scmp.eq.s32.totalorder %s23, 1
      %p151 = por %p149, %p150
      %p152 = scmp.ne.s32.totalorder %s144, %s147
      %p153 = scmp.eq.s32.totalorder %s23, 0
      %p154 = por %p152, %p153
      %p155 = scmp.ne.s32.totalorder %s144, %s147
      %p156 = scmp.eq.s32.totalorder %s28, 1
      %p157 = por %p155, %p156
      %p158 = scmp.ne.s32.totalorder %s147, %s148
      %p159 = scmp.eq.s32.totalorder %s28, 0
      %p160 = por %p158, %p159
      %p161 = scmp.ne.s32.totalorder %s147, %s148
      %p162 = scmp.eq.s32.totalorder %s29, 1
      %p163 = por %p161, %p162
      %p165 = scmp.ne.s32.totalorder %s148, %s164
      %p166 = scmp.eq.s32.totalorder %s29, 0
      %p167 = por %p165, %p166
      %s168 = sadd.s32 %s30, %s31
      %s169 = sadd.s32 %s49, %s45
      %s170 = ssub.s32 %s168, %s169
      %p171 = scmp.eq.s32.totalorder %s170, 0
      %s173 = sadd.s32 %s172, 1
      %s174 = scalar_select %p171, %s172, %s173
      %p177 = pneg %p171
      %p178 = scmp.eq.s32.totalorder %s23, 1
      %p179 = por %p177, %p178
      %p180 = scmp.ne.s32.totalorder %s172, %s175
      %p181 = scmp.eq.s32.totalorder %s23, 0
      %p182 = por %p180, %p181
      %p183 = scmp.ne.s32.totalorder %s172, %s175
      %p184 = scmp.eq.s32.totalorder %s28, 1
      %p185 = por %p183, %p184
      %p186 = scmp.ne.s32.totalorder %s175, %s176
      %p187 = scmp.eq.s32.totalorder %s28, 0
      %p188 = por %p186, %p187
      %p189 = scmp.ne.s32.totalorder %s175, %s176
      %p190 = scmp.eq.s32.totalorder %s29, 1
      %p191 = por %p189, %p190
      %p193 = scmp.ne.s32.totalorder %s176, %s192
      %p194 = scmp.eq.s32.totalorder %s29, 0
      %p195 = por %p193, %p194
      %p196 = scmp.le.s32.totalorder 1, %s23
      %p197 = scmp.lt.s32.totalorder %s23, 3
      %p198 = pnand %p196, %p197
      %p199 = pneg %p198
      // Predicated region
      $region9: #{tpu_custom_call.1} parent=5 // pred_check
        _
      $region10: #{tpu_custom_call.1} parent=5 // pred_check_branch
        %201 = sbr.rel (%p198) target = $region12
      $region11: #{tpu_custom_call.1} parent=5 // pred_region
        %s202 = ssub.s32 %s23, 1
      $region12: #{tpu_custom_call.1} parent=5 // pred_fallthru
        _
      %p203 = scmp.lt.s32.totalorder %s23, 2
      // Predicated region
      $region13: #{tpu_custom_call.1} parent=5 // pred_check
        %p204 = pneg %p203
      $region14: #{tpu_custom_call.1} parent=5 // pred_check_branch
        %206 = sbr.rel (%p204) target = $region16
      $region15: #{tpu_custom_call.1} parent=5 // pred_region
        // Predicated region
        $region17: #{tpu_custom_call.1} parent=15 // pred_check
          %p207 = pneg %p66
        $region18: #{tpu_custom_call.1} parent=15 // pred_check_branch
          %209 = sbr.rel (%p207) target = $region20
        $region19: #{tpu_custom_call.1} parent=15 // pred_region
          %s210 = sand.u32 %s56, 1
          %s211 = scalar_lea.sflag [#allocation3], %s210
          %s212 = sand.u32 %s56, 1
          %s213 = smul.addr %s212, 6
          %s214 = scalar_lea.vmem [#allocation2], %s213
          %s215 = sadd.s32 %s31, %s32
          %217 = vsyncadd %s211, 0
          %s218 = smul.addr %s30, 3
          %s219 = sadd.s32 %s215, %s218
          %s220 = smul.addr %s219, 2
          %s221 = scalar_lea.hbm %s0, %s220
          %s222 = sshll.u32 %s221, 4
          %s223 = int_to_ptr.hbm [resolvable:$true] %s222
          %s224 = sshll.u32 %s214, 4
          %s225 = int_to_ptr.vmem [resolvable:$true] %s224
          %230 = dma.hbm_to_vmem [thread:$0]  %s223, 96, %s225, %s211, 32, 32, 2
        $region20: #{tpu_custom_call.1} parent=15 // pred_fallthru
          _
        // Predicated region
        $region21: #{tpu_custom_call.1} parent=15 // pred_check
          %p231 = pneg %p96
        $region22: #{tpu_custom_call.1} parent=15 // pred_check_branch
          %233 = sbr.rel (%p231) target = $region24
        $region23: #{tpu_custom_call.1} parent=15 // pred_region
          %s234 = sand.u32 %s23, 1
          %s235 = scalar_lea.sflag [#allocation6], %s234
          %s236 = sand.u32 %s86, 1
          %s237 = smul.addr %s236, 6
          %s238 = scalar_lea.vmem [#allocation5], %s237
          %s239 = sadd.s32 %s31, %s32
          %241 = vsyncadd %s235, 0
          %s242 = smul.addr %s30, 3
          %s243 = sadd.s32 %s239, %s242
          %s244 = smul.addr %s243, 2
          %s245 = scalar_lea.hbm %s1, %s244
          %s246 = sshll.u32 %s245, 4
          %s247 = int_to_ptr.hbm [resolvable:$true] %s246
          %s248 = sshll.u32 %s238, 4
          %s249 = int_to_ptr.vmem [resolvable:$true] %s248
          %254 = dma.hbm_to_vmem [thread:$0]  %s247, 96, %s249, %s235, 32, 32, 2
        $region24: #{tpu_custom_call.1} parent=15 // pred_fallthru
          _
        // Predicated region
        $region25: #{tpu_custom_call.1} parent=15 // pred_check
          %p255 = pneg %p126
        $region26: #{tpu_custom_call.1} parent=15 // pred_check_branch
          %257 = sbr.rel (%p255) target = $region28
        $region27: #{tpu_custom_call.1} parent=15 // pred_region
          %s258 = sand.u32 %s23, 1
          %s259 = scalar_lea.sflag [#allocation6], %s258
          %s260 = sand.u32 %s116, 1
          %s261 = smul.addr %s260, 2
          %s262 = scalar_lea.vmem [#allocation7], %s261
          %s263 = sadd.s32 %s31, %s32
          %265 = vsyncadd %s259, 0
          %s266 = sadd.s32 %s263, %s30
          %s267 = smul.addr %s266, 2
          %s268 = scalar_lea.hbm %s2, %s267
          %s270 = sshll.u32 %s268, 4
          %s271 = int_to_ptr.hbm [resolvable:$true] %s270
          %s272 = sshll.u32 %s262, 4
          %s273 = int_to_ptr.vmem [resolvable:$true] %s272
          %275 = dma.hbm_to_vmem [thread:$0]  %s271, 32, %s273, %s259
        $region28: #{tpu_custom_call.1} parent=15 // pred_fallthru
          _
      $region16: #{tpu_custom_call.1} parent=5 // pred_fallthru
        _
      %p276 = scmp.le.s32.totalorder 1, %s23
      %p277 = scmp.lt.s32.totalorder %s23, 3
      %p278 = pnand %p276, %p277
      %p279 = pneg %p278
      // Predicated region
      $region29: #{tpu_custom_call.1} parent=5 // pred_check
        _
      $region30: #{tpu_custom_call.1} parent=5 // pred_check_branch
        %281 = sbr.rel (%p278) target = $region32
      $region31: #{tpu_custom_call.1} parent=5 // pred_region
        %s282 = ssub.s32 %s23, 1
        %s283 = sand.u32 %s59, 1
        %s284 = scalar_lea.sflag [#allocation3], %s283
        %s285 = sand.u32 %s59, 1
        %s286 = smul.addr %s285, 6
        %s287 = scalar_lea.vmem [#allocation2], %s286
        // Predicated region
        $region33: #{tpu_custom_call.1} parent=31 // pred_check
          %p288 = pneg %p72
        $region34: #{tpu_custom_call.1} parent=31 // pred_check_branch
          %290 = sbr.rel (%p288) target = $region36
        $region35: #{tpu_custom_call.1} parent=31 // pred_region
          %292 = dma.done %s284, 96
        $region36: #{tpu_custom_call.1} parent=31 // pred_fallthru
          _
        %s293 = sand.u32 %s28, 1
        %s294 = scalar_lea.sflag [#allocation6], %s293
        %s295 = sand.u32 %s89, 1
        %s296 = smul.addr %s295, 6
        %s297 = scalar_lea.vmem [#allocation5], %s296
        // Predicated region
        $region37: #{tpu_custom_call.1} parent=31 // pred_check
          %p298 = pneg %p102
        $region38: #{tpu_custom_call.1} parent=31 // pred_check_branch
          %300 = sbr.rel (%p298) target = $region40
        $region39: #{tpu_custom_call.1} parent=31 // pred_region
          %302 = dma.done %s294, 96
        $region40: #{tpu_custom_call.1} parent=31 // pred_fallthru
          _
        %s303 = sand.u32 %s28, 1
        %s304 = scalar_lea.sflag [#allocation6], %s303
        %s305 = sand.u32 %s119, 1
        %s306 = smul.addr %s305, 2
        %s307 = scalar_lea.vmem [#allocation7], %s306
        // Predicated region
        $region41: #{tpu_custom_call.1} parent=31 // pred_check
          %p308 = pneg %p132
        $region42: #{tpu_custom_call.1} parent=31 // pred_check_branch
          %310 = sbr.rel (%p308) target = $region44
        $region43: #{tpu_custom_call.1} parent=31 // pred_region
          %312 = dma.done %s304, 32
        $region44: #{tpu_custom_call.1} parent=31 // pred_fallthru
          _
        %s313 = sand.u32 %s59, 1
        %s314 = scalar_lea.sflag [#allocation3], %s313
        %s315 = sand.u32 %s59, 1
        %s316 = smul.addr %s315, 6
        %s317 = scalar_lea.vmem [#allocation2], %s316
        %p318 = pneg %p72
        %p319 = pneg %p69
        %s320 = sand.u32 %s28, 1
        %s321 = scalar_lea.sflag [#allocation6], %s320
        %s322 = sand.u32 %s89, 1
        %s323 = smul.addr %s322, 6
        %s324 = scalar_lea.vmem [#allocation5], %s323
        %p325 = pneg %p102
        %p326 = pneg %p99
        %s327 = sand.u32 %s28, 1
        %s328 = scalar_lea.sflag [#allocation6], %s327
        %s329 = sand.u32 %s119, 1
        %s330 = smul.addr %s329, 2
        %s331 = scalar_lea.vmem [#allocation7], %s330
        %p332 = pneg %p132
        %p333 = pneg %p129
        %p334 = pneg %p160
        %p335 = pneg %p157
        %s336 = sand.u32 %s147, 1
        %s337 = scalar_lea.sflag [#allocation4], %s336
        %s338 = sand.u32 %s147, 1
        %s339 = smul.addr %s338, 8
        %s340 = scalar_lea.vmem [#allocation8], %s339
        %p341 = pneg %p188
        %p342 = pneg %p185
        %s343 = sand.u32 %s175, 1
        %s344 = scalar_lea.sflag [#allocation10], %s343
        %s345 = sand.u32 %s175, 1
        %s346 = smul.addr %s345, 8
        %s347 = scalar_lea.vmem [#allocation9], %s346
        %s348 = sadd.s32 %s34, %s35
        %s349 = sadd.s32 %s34, %s35
        %s350 = sadd.s32 %s34, %s35
        %s351 = sadd.s32 %s33, %s34
        %s352 = sadd.s32 %s33, %s34
        %p353 = scmp.eq.s32.totalorder %s35, 0
        // Predicated region
        $region45: #{tpu_custom_call.1} parent=31 // pred_check
          %p354 = pneg %p353
        $region46: #{tpu_custom_call.1} parent=31 // pred_check_branch
          %356 = sbr.rel (%p354) target = $region48
        $region47: #{tpu_custom_call.1} parent=31 // pred_region
          %357 = vst [vmem:[%s340] sm:$0xff] 0.0
          %358 = vst [vmem:[%s347] sm:$0xff] 0.0
        $region48: #{tpu_custom_call.1} parent=31 // pred_fallthru
          _
        %v359 = vld [vmem:[%s287] sm:$0x3]
        %s360 = scalar_lea.vmem %s287, 2 [#allocation2]
        %v361 = vld [vmem:[%s360] sm:$0x3]
        %s362 = scalar_lea.vmem %s287, 4 [#allocation2]
        %v363 = vld [vmem:[%s362] sm:$0x3]
        %vm364 = vcmp.gt.f32.partialorder %v359, 0.04045
        %v365 = vadd.f32 %v359, 0.055
        %v366 = vmul.f32 %v365, 0.9478673
        %v367 = vpow.f32 %v366, 2.4
        %v368 = vmul.f32 %v359, 0.07739938
        %v369 = vsel %vm364, %v367, %v368
        %vm370 = vcmp.gt.f32.partialorder %v361, 0.04045
        %v371 = vadd.f32 %v361, 0.055
        %v372 = vmul.f32 %v371, 0.9478673
        %v373 = vpow.f32 %v372, 2.4
        %v374 = vmul.f32 %v361, 0.07739938
        %v375 = vsel %vm370, %v373, %v374
        %vm376 = vcmp.gt.f32.partialorder %v363, 0.04045
        %v377 = vadd.f32 %v363, 0.055
        %v378 = vmul.f32 %v377, 0.9478673
        %v379 = vpow.f32 %v378, 2.4
        %v380 = vmul.f32 %v363, 0.07739938
        %v381 = vsel %vm376, %v379, %v380
        %v382 = vmul.f32 %v369, 0.412453
        %v383 = vmul.f32 %v375, 0.35758
        %v384 = vadd.f32 %v382, %v383
        %v385 = vmul.f32 %v381, 0.180423
        %v386 = vadd.f32 %v384, %v385
        %v387 = vmul.f32 %v386, 1.052111
        %v388 = vmul.f32 %v369, 0.212671
        %v389 = vmul.f32 %v375, 0.71516
        %v390 = vadd.f32 %v388, %v389
        %v391 = vmul.f32 %v381, 0.072169
        %v392 = vadd.f32 %v390, %v391
        %v393 = vmul.f32 %v369, 0.019334
        %v394 = vmul.f32 %v375, 0.119193
        %v395 = vadd.f32 %v393, %v394
        %v396 = vmul.f32 %v381, 0.950227
        %v397 = vadd.f32 %v395, %v396
        %v398 = vmul.f32 %v397, 0.91841704
        %vm399 = vcmp.gt.f32.partialorder %v387, 0.008856
        %v400 = vpow.f32 %v387, 0.33333334
        %v401 = vmul.f32 %v387, 7.787
        %v402 = vadd.f32 %v401, 0.13793103
        %v403 = vsel %vm399, %v400, %v402
        %vm404 = vcmp.gt.f32.partialorder %v392, 0.008856
        %v405 = vpow.f32 %v392, 0.33333334
        %v406 = vmul.f32 %v392, 7.787
        %v407 = vadd.f32 %v406, 0.13793103
        %v408 = vsel %vm404, %v405, %v407
        %vm409 = vcmp.gt.f32.partialorder %v398, 0.008856
        %v410 = vpow.f32 %v398, 0.33333334
        %v411 = vmul.f32 %v398, 7.787
        %v412 = vadd.f32 %v411, 0.13793103
        %v413 = vsel %vm409, %v410, %v412
        %v414 = vld [vmem:[%s297] sm:$0x3]
        %s415 = scalar_lea.vmem %s297, 2 [#allocation5]
        %v416 = vld [vmem:[%s415] sm:$0x3]
        %s417 = scalar_lea.vmem %s297, 4 [#allocation5]
        %v418 = vld [vmem:[%s417] sm:$0x3]
        %vm419 = vcmp.gt.f32.partialorder %v414, 0.04045
        %v420 = vadd.f32 %v414, 0.055
        %v421 = vmul.f32 %v420, 0.9478673
        %v422 = vpow.f32 %v421, 2.4
        %v423 = vmul.f32 %v414, 0.07739938
        %v424 = vsel %vm419, %v422, %v423
        %vm425 = vcmp.gt.f32.partialorder %v416, 0.04045
        %v426 = vadd.f32 %v416, 0.055
        %v427 = vmul.f32 %v426, 0.9478673
        %v428 = vpow.f32 %v427, 2.4
        %v429 = vmul.f32 %v416, 0.07739938
        %v430 = vsel %vm425, %v428, %v429
        %vm431 = vcmp.gt.f32.partialorder %v418, 0.04045
        %v432 = vadd.f32 %v418, 0.055
        %v433 = vmul.f32 %v432, 0.9478673
        %v434 = vpow.f32 %v433, 2.4
        %v435 = vmul.f32 %v418, 0.07739938
        %v436 = vsel %vm431, %v434, %v435
        %v437 = vmul.f32 %v424, 0.412453
        %v438 = vmul.f32 %v430, 0.35758
        %v439 = vadd.f32 %v437, %v438
        %v440 = vmul.f32 %v436, 0.180423
        %v441 = vadd.f32 %v439, %v440
        %v442 = vmul.f32 %v441, 1.052111
        %v443 = vmul.f32 %v424, 0.212671
        %v444 = vmul.f32 %v430, 0.71516
        %v445 = vadd.f32 %v443, %v444
        %v446 = vmul.f32 %v436, 0.072169
        %v447 = vadd.f32 %v445, %v446
        %v448 = vmul.f32 %v424, 0.019334
        %v449 = vmul.f32 %v430, 0.119193
        %v450 = vadd.f32 %v448, %v449
        %v451 = vmul.f32 %v436, 0.950227
        %v452 = vadd.f32 %v450, %v451
        %v453 = vmul.f32 %v452, 0.91841704
        %vm454 = vcmp.gt.f32.partialorder %v442, 0.008856
        %v455 = vpow.f32 %v442, 0.33333334
        %v456 = vmul.f32 %v442, 7.787
        %v457 = vadd.f32 %v456, 0.13793103
        %v458 = vsel %vm454, %v455, %v457
        %vm459 = vcmp.gt.f32.partialorder %v447, 0.008856
        %v460 = vpow.f32 %v447, 0.33333334
        %v461 = vmul.f32 %v447, 7.787
        %v462 = vadd.f32 %v461, 0.13793103
        %v463 = vsel %vm459, %v460, %v462
        %vm464 = vcmp.gt.f32.partialorder %v453, 0.008856
        %v465 = vpow.f32 %v453, 0.33333334
        %v466 = vmul.f32 %v453, 7.787
        %v467 = vadd.f32 %v466, 0.13793103
        %v468 = vsel %vm464, %v465, %v467
        %v469 = vsub.f32 %v403, %v408
        %v470 = vsub.f32 %v458, %v463
        %v471 = vsub.f32 %v469, %v470
        %v472 = vand.u32 2147483647, %v471
        %v473 = vmul.f32 %v472, 500.0
        %v474 = vsub.f32 %v408, %v413
        %v475 = vsub.f32 %v463, %v468
        %v476 = vsub.f32 %v474, %v475
        %v477 = vand.u32 2147483647, %v476
        %v478 = vmul.f32 %v477, 200.0
        %v479 = vadd.f32 %v473, %v478
        %v480 = vmul.f32 %v479, 0.5
        %v481 = vld [vmem:[%s307] sm:$0x3]
        %v482 = vld [vmem:[%s340] sm:$0xff]
        %v483 = vmul.f32 %v480, %v481
        %vm484 = vcmask 1041408
        %v485 = vsel %vm484, %v483, 0.0
        %v486 = vrot.slane %v485, 4
        %v487 = vadd.f32 %v485, %v486
        %v488 = vrot.slane %v487, 2
        %v489 = vadd.f32 %v487, %v488
        %v490 = vrot.slane %v489, 1
        %v491 = vadd.f32 %v489, %v490
        %v492 = vlaneseq
        %v493 = vshrl.u32 %v492, 7
        %vm494 = vcmp.eq.s32.totalorder %v493, 0
        %v495 = vsel %vm494, %v491, 0.0
        %v496 = vadd.f32 %v482, %v495
        %497 = vst [vmem:[%s340] sm:$0xff] %v496
        %v498 = vld [vmem:[%s347] sm:$0xff]
        %v499 = vsel %vm484, %v481, 0.0
        %v500 = vrot.slane %v499, 4
        %v501 = vadd.f32 %v499, %v500
        %v502 = vrot.slane %v501, 2
        %v503 = vadd.f32 %v501, %v502
        %v504 = vrot.slane %v503, 1
        %v505 = vadd.f32 %v503, %v504
        %v506 = vsel %vm494, %v505, 0.0
        %v507 = vadd.f32 %v498, %v506
        %508 = vst [vmem:[%s347] sm:$0xff] %v507
        %s509 = sand.u32 %s147, 1
        %s510 = scalar_lea.sflag [#allocation4], %s509
        %s511 = sand.u32 %s147, 1
        %s512 = smul.addr %s511, 8
        %s513 = scalar_lea.vmem [#allocation8], %s512
        %s514 = sand.u32 %s175, 1
        %s515 = scalar_lea.sflag [#allocation10], %s514
        %s516 = sand.u32 %s175, 1
        %s517 = smul.addr %s516, 8
        %s518 = scalar_lea.vmem [#allocation9], %s517
        // Predicated region
        $region49: #{tpu_custom_call.1} parent=31 // pred_check
          %p519 = pneg %p157
        $region50: #{tpu_custom_call.1} parent=31 // pred_check_branch
          %521 = sbr.rel (%p519) target = $region52
        $region51: #{tpu_custom_call.1} parent=31 // pred_region
          %s522 = sadd.s32 %s33, %s34
          %524 = vsyncadd %s510, 0
          %s525 = smul.addr %s522, 8
          %s526 = scalar_lea.hbm %s3, %s525
          %s528 = sshll.u32 %s513, 4
          %s529 = int_to_ptr.vmem [resolvable:$true] %s528
          %s530 = sshll.u32 %s526, 4
          %s531 = int_to_ptr.hbm [resolvable:$true] %s530
          %533 = dma.vmem_to_hbm [thread:$0]  %s529, 128, %s531, %s510
        $region52: #{tpu_custom_call.1} parent=31 // pred_fallthru
          _
        // Predicated region
        $region53: #{tpu_custom_call.1} parent=31 // pred_check
          %p534 = pneg %p185
        $region54: #{tpu_custom_call.1} parent=31 // pred_check_branch
          %536 = sbr.rel (%p534) target = $region56
        $region55: #{tpu_custom_call.1} parent=31 // pred_region
          %s537 = sadd.s32 %s33, %s34
          %539 = vsyncadd %s515, 0
          %s540 = smul.addr %s537, 8
          %s541 = scalar_lea.hbm %s4, %s540
          %s543 = sshll.u32 %s518, 4
          %s544 = int_to_ptr.vmem [resolvable:$true] %s543
          %s545 = sshll.u32 %s541, 4
          %s546 = int_to_ptr.hbm [resolvable:$true] %s545
          %548 = dma.vmem_to_hbm [thread:$0]  %s544, 128, %s546, %s515
        $region56: #{tpu_custom_call.1} parent=31 // pred_fallthru
          _
      $region32: #{tpu_custom_call.1} parent=5 // pred_fallthru
        _
      %p549 = scmp.le.s32.totalorder 2, %s23
      // Predicated region
      $region57: #{tpu_custom_call.1} parent=5 // pred_check
        %p550 = pneg %p549
      $region58: #{tpu_custom_call.1} parent=5 // pred_check_branch
        %552 = sbr.rel (%p550) target = $region60
      $region59: #{tpu_custom_call.1} parent=5 // pred_region
        %s553 = ssub.s32 %s23, 2
        // Predicated region
        $region61: #{tpu_custom_call.1} parent=59 // pred_check
          %p554 = pneg %p163
        $region62: #{tpu_custom_call.1} parent=59 // pred_check_branch
          %556 = sbr.rel (%p554) target = $region64
        $region63: #{tpu_custom_call.1} parent=59 // pred_region
          %s557 = sand.u32 %s148, 1
          %s558 = scalar_lea.sflag [#allocation4], %s557
          %s559 = sand.u32 %s148, 1
          %s560 = smul.addr %s559, 8
          %s561 = scalar_lea.vmem [#allocation8], %s560
          %563 = dma.done %s558, 128
        $region64: #{tpu_custom_call.1} parent=59 // pred_fallthru
          _
        // Predicated region
        $region65: #{tpu_custom_call.1} parent=59 // pred_check
          %p564 = pneg %p191
        $region66: #{tpu_custom_call.1} parent=59 // pred_check_branch
          %566 = sbr.rel (%p564) target = $region68
        $region67: #{tpu_custom_call.1} parent=59 // pred_region
          %s567 = sand.u32 %s176, 1
          %s568 = scalar_lea.sflag [#allocation10], %s567
          %s569 = sand.u32 %s176, 1
          %s570 = smul.addr %s569, 8
          %s571 = scalar_lea.vmem [#allocation9], %s570
          %573 = dma.done %s568, 128
        $region68: #{tpu_custom_call.1} parent=59 // pred_fallthru
          _
      $region60: #{tpu_custom_call.1} parent=5 // pred_fallthru
        _
    $region6: #{tpu_custom_call.1} parent=1 // loop_footer
      %s27 = sadd.s32 1, %s23
    $region7: #{tpu_custom_call.1} parent=1 // loop_footer_branch
      %22 = sbr.rel target = $region3
    $region8: #{tpu_custom_call.1} parent=1 // loop_exit
      _
    %574 = vsyncpa [#allocation3], 1
    %s575 = scalar_lea.sflag [#allocation3], 1
    %576 = vsyncpa %s575, 1
    %577 = vsyncpa [#allocation6], 1
    %s578 = scalar_lea.sflag [#allocation6], 1
    %579 = vsyncpa %s578, 1
    %580 = vsyncpa [#allocation4], 1
    %s581 = scalar_lea.sflag [#allocation4], 1
    %582 = vsyncpa %s581, 1
    %583 = vsyncpa [#allocation10], 1
    %s584 = scalar_lea.sflag [#allocation10], 1
    %585 = vsyncpa %s584, 1

</llo_original>
